<compile_context>
chip_gen: v5e
topology: v5e:2x2
jax: 0.10.0
libtpu: 0.0.40
codegen_flags: <defaults>
</compile_context>

<pallas_src>
import math

import jax
import jax.numpy as jnp
import numpy as np
from jax.experimental import pallas as pl
from jax.experimental.pallas import tpu as pltpu

_BN_EPS = 1e-5


# ---------------------------------------------------------------------------
# Plain-JAX grouping helpers (mirror the PyTorch utils exactly).
# ---------------------------------------------------------------------------
def farthest_point_sample(xyz, npoint):
    # Matches the provided PyTorch source, which is itself an arange stub.
    B = xyz.shape[0]
    return jnp.broadcast_to(jnp.arange(npoint, dtype=jnp.int32), (B, npoint))


def index_points(points, idx):
    B = points.shape[0]
    batch = jnp.arange(B, dtype=idx.dtype).reshape((B,) + (1,) * (idx.ndim - 1))
    return points[batch, idx]


def square_distance(src, dst):
    dist = -2.0 * jnp.einsum('bnc,bmc->bnm', src, dst)
    dist = dist + jnp.sum(src ** 2, axis=-1)[:, :, None]
    dist = dist + jnp.sum(dst ** 2, axis=-1)[:, None, :]
    return dist


def query_ball_point(radius, nsample, xyz, new_xyz):
    B, N, _ = xyz.shape
    S = new_xyz.shape[1]
    sqrdists = square_distance(new_xyz, xyz)                          # [B, S, N]
    group_idx = jnp.broadcast_to(jnp.arange(N, dtype=jnp.int32), (B, S, N))
    group_idx = jnp.where(sqrdists > radius ** 2, N, group_idx)
    group_idx = jnp.sort(group_idx, axis=-1)[:, :, :nsample]
    group_first = jnp.broadcast_to(group_idx[:, :, :1], group_idx.shape)
    return jnp.where(group_idx == N, group_first, group_idx)


# ---------------------------------------------------------------------------
# Hardware-aware sizing helpers.
# ---------------------------------------------------------------------------
def _tpu_vmem_bytes():
    try:
        info = pltpu.get_tpu_info()
        cap = int(getattr(info, "vmem_capacity_bytes", 0) or 0)
        if cap > 0:
            return cap
    except Exception:
        pass
    return 64 << 20                       # v7x-safe fallback


def _lane_pad(c):
    return ((c + 127) // 128) * 128


def _default_max_rows(c_in, chans, itemsize):
    """Row budget per tile from the VMEM capacity of the local generation."""
    budget = int(_tpu_vmem_bytes() * 0.35)
    widths = [c_in] + list(chans)
    worst = 1
    for cp_, cn in zip(widths[:-1], widths[1:]):
        # double-buffered in/out blocks (lane padded) + f32 intermediates
        per_row = ((2 * _lane_pad(cp_) + 2 * _lane_pad(cn)) * itemsize
                   + 4 * (_lane_pad(cp_) + _lane_pad(cn)))
        worst = max(worst, per_row)
    return max(1024, budget // worst)


def _compiler_params():
    cap = _tpu_vmem_bytes()
    limit = max(32 << 20, min(cap, 128 << 20) - (4 << 20))
    return pltpu.CompilerParams(dimension_semantics=("parallel",),
                                vmem_limit_bytes=int(limit))


def _choose_tile_groups(G, K, c_last, max_rows, sub):
    """Groups per tile: multiple of `sub` sublane-groups, bounded rows, and
    (when possible) tile_g*c_last % 1024 == 0 so the pooled output can be
    stored as dense (rows, 128) lanes."""
    cap = max(sub, max_rows // max(K, 1))
    if c_last % 128 == 0:
        mult, packed = sub, False          # output already lane-dense
    else:
        m = max(8, 1024 // math.gcd(1024, c_last))
        mult = (m * sub) // math.gcd(m, sub)
        packed = cap >= mult
        if not packed:
            mult = sub
    tile_g = max((cap // mult) * mult, mult)
    tile_g = min(tile_g, -(-G // mult) * mult)
    return tile_g, packed


# ---------------------------------------------------------------------------
# Pallas kernels for one MSG branch's fused MLP.
# ---------------------------------------------------------------------------
def _make_layer_kernel(has_fold, tile_m, m_real, needs_mask):
    """One MLP layer over one row tile.

    Reads the previous layer's cached (pre-BN) activation tile, applies the
    previous layer's folded BN scale/shift + ReLU (if any), matmuls with this
    layer's weight, writes the new pre-BN activation tile and emits this
    tile's (sum, M2) BN partial statistics (two-pass within the tile)."""

    def kernel(*refs):
        if has_fold:
            x_ref, w_ref, scale_ref, shift_ref, h_ref, sum_ref, m2_ref = refs
        else:
            x_ref, w_ref, h_ref, sum_ref, m2_ref = refs

        t = pl.program_id(0)
        row0 = t * tile_m

        valid = None
        if needs_mask:
            rows = jax.lax.broadcasted_iota(jnp.int32, (tile_m, 1), 0)
            valid = rows < (m_real - row0)

        a = x_ref[...]
        if has_fold:
            # Folded train-mode BN (scale/shift) + ReLU of the previous layer,
            # done in f32 on the VPU; conv biases cancel against the BN mean.
            a = jnp.maximum(a.astype(jnp.float32) * scale_ref[...]
                            + shift_ref[...], 0.0)
            if needs_mask:
                a = jnp.where(valid, a, 0.0)     # keep pad rows exactly zero
        a = a.astype(w_ref.dtype)                # MXU operand dtype (bf16/f32)

        h = jnp.dot(a, w_ref[...], preferred_element_type=jnp.float32)
        h_ref[...] = h.astype(h_ref.dtype)

        # Per-tile two-pass stats: tile mean, then squared deviations (M2).
        n_rows = jnp.minimum(m_real - row0, tile_m).astype(jnp.float32)
        s = jnp.sum(h, axis=0, keepdims=True)                     # [1, c]
        mu = s / n_rows
        dev = h - mu
        sq = dev * dev
        if needs_mask:
            sq = jnp.where(valid, sq, 0.0)
        sum_ref[...] = s.reshape(sum_ref.shape)
        m2_ref[...] = jnp.sum(sq, axis=0, keepdims=True).reshape(m2_ref.shape)

    return kernel


def _make_apply_kernel(nsample, tile_g, c_last, out_block_shape):
    """Fold + ReLU of the last layer, max over the K neighbours per group,
    store the pooled tile (lane-packed (rows, 128) when requested)."""

    def kernel(h_ref, scale_ref, shift_ref, o_ref):
        h = jnp.maximum(h_ref[...].astype(jnp.float32) * scale_ref[...]
                        + shift_ref[...], 0.0)
        # Layout-free reshape when K % 8 == 0 (rows are group-major).
        pooled = jnp.max(h.reshape(tile_g, nsample, c_last), axis=1)
        o_ref[...] = pooled.reshape(out_block_shape).astype(o_ref.dtype)

    return kernel


def _msg_branch_mlp(grouped, weights, gammas, betas, *, compute_dtype,
                    max_rows_per_tile=None):
    """grouped: [B, S, K, C_in] -> per-group max-pooled features [B, C_last, S]."""
    B, S, K, c_in = grouped.shape
    G = B * S
    M = G * K
    L = len(weights)
    chans = [int(w.shape[1]) for w in weights]
    c_last = chans[-1]
    f32 = jnp.float32
    itemsize = jnp.dtype(compute_dtype).itemsize

    if max_rows_per_tile is None:
        max_rows_per_tile = _default_max_rows(c_in, chans, itemsize)

    sub = 8 if itemsize >= 4 else max(8, 32 // itemsize)   # sublane packing
    tile_g, packed = _choose_tile_groups(G, K, c_last, max_rows_per_tile, sub)
    num_tiles = -(-G // tile_g)
    Gp = num_tiles * tile_g
    tile_m = tile_g * K
    Mp = Gp * K
    needs_mask = Mp != M

    cp = _compiler_params()

    x2d = grouped.reshape(M, c_in).astype(compute_dtype)    # rows group-major
    if needs_mask:
        x2d = jnp.pad(x2d, ((0, Mp - M), (0, 0)))

    # Static per-tile real-row counts for the Chan variance combine.
    counts = np.minimum(tile_m, np.maximum(M - np.arange(num_tiles) * tile_m, 0))
    cnt = jnp.asarray(counts, dtype=f32).reshape(num_tiles, 1, 1)

    h_prev = x2d
    scale = shift = None
    for l in range(L):
        c_prev = int(h_prev.shape[1])
        c_out = chans[l]
        w_l = weights[l].astype(compute_dtype)
        has_fold = l > 0

        in_specs = [pl.BlockSpec((tile_m, c_prev), lambda t: (t, 0)),
                    pl.BlockSpec((c_prev, c_out), lambda t: (0, 0))]
        operands = [h_prev, w_l]
        if has_fold:
            in_specs += [pl.BlockSpec((1, c_prev), lambda t: (0, 0)),
                         pl.BlockSpec((1, c_prev), lambda t: (0, 0))]
            operands += [scale, shift]

        h_cache, tsum, tm2 = pl.pallas_call(
            _make_layer_kernel(has_fold, tile_m, M, needs_mask),
            out_shape=(jax.ShapeDtypeStruct((Mp, c_out), compute_dtype),
                       jax.ShapeDtypeStruct((num_tiles, 1, c_out), f32),
                       jax.ShapeDtypeStruct((num_tiles, 1, c_out), f32)),
            grid=(num_tiles,),
            in_specs=in_specs,
            out_specs=(pl.BlockSpec((tile_m, c_out), lambda t: (t, 0)),
                       pl.BlockSpec((1, 1, c_out), lambda t: (t, 0, 0)),
                       pl.BlockSpec((1, 1, c_out), lambda t: (t, 0, 0))),
            compiler_params=cp,
        )(*operands)

        # Chan combine of per-tile (sum, M2) -> global mean/var; fold into one
        # per-channel scale & shift.  Tiny [T, 1, C] math in plain JAX.
        total = jnp.sum(tsum, axis=0)                          # [1, c_out]
        mean = total / float(M)
        mu_t = tsum / cnt
        diff = mu_t - mean
        m2 = jnp.sum(tm2, axis=0) + jnp.sum(cnt * diff * diff, axis=0)
        var = m2 / float(M)
        scale = (gammas[l] * jax.lax.rsqrt(var + _BN_EPS)).astype(f32)
        shift = (betas[l] - mean * scale).astype(f32)
        h_prev = h_cache

    def run_apply(pack):
        if pack:
            blk = (tile_g * c_last // 128, 128)
            out_shape = jax.ShapeDtypeStruct((Gp * c_last // 128, 128), f32)
        else:
            blk = (tile_g, c_last)
            out_shape = jax.ShapeDtypeStruct((Gp, c_last), f32)
        out = pl.pallas_call(
            _make_apply_kernel(K, tile_g, c_last, blk),
            out_shape=out_shape,
            grid=(num_tiles,),
            in_specs=[pl.BlockSpec((tile_m, c_last), lambda t: (t, 0)),
                      pl.BlockSpec((1, c_last), lambda t: (0, 0)),
                      pl.BlockSpec((1, c_last), lambda t: (0, 0))],
            out_specs=pl.BlockSpec(blk, lambda t: (t, 0)),
            compiler_params=cp,
        )(h_prev, scale, shift)
        return out.reshape(Gp, c_last)

    if packed:
        try:
            pooled = run_apply(True)
        except Exception:
            # TODO(synk): lane-packing the pooled tile needs an in-kernel
            # relayout reshape; fall back to the masked-store layout if this
            # toolchain rejects it.
            pooled = run_apply(False)
    else:
        pooled = run_apply(False)

    feat = pooled[:G].reshape(B, S, c_last)                   # drop pad groups
    return jnp.transpose(feat, (0, 2, 1))                     # [B, C_last, S]


# ---------------------------------------------------------------------------
# Full PointNetSetAbstractionMsg forward.
# ---------------------------------------------------------------------------
def pointnet_sa_msg(xyz, points, params, npoint, radius_list, nsample_list, *,
                    compute_dtype=jnp.bfloat16, max_rows_per_tile=None):
    """xyz: [B, 3, N], points: [B, D, N] or None.
    Returns (new_xyz [B, 3, S], new_points_concat [B, sum(mlp[-1]), S])."""
    S = npoint
    xyz_t = jnp.transpose(xyz, (0, 2, 1))                              # [B, N, 3]
    pts_t = jnp.transpose(points, (0, 2, 1)) if points is not None else None
    new_xyz = index_points(xyz_t, farthest_point_sample(xyz_t, S))     # [B, S, 3]

    outs = []
    for i, radius in enumerate(radius_list):
        K = nsample_list[i]
        gidx = query_ball_point(radius, K, xyz_t, new_xyz)             # [B, S, K]
        gxyz = index_points(xyz_t, gidx) - new_xyz[:, :, None, :]      # [B, S, K, 3]
        if pts_t is not None:
            grouped = jnp.concatenate([index_points(pts_t, gidx), gxyz], axis=-1)
        else:
            grouped = gxyz
        br = params[i]
        outs.append(_msg_branch_mlp(grouped, br['w'], br['gamma'], br['beta'],
                                    compute_dtype=compute_dtype,
                                    max_rows_per_tile=max_rows_per_tile))
    return jnp.transpose(new_xyz, (0, 2, 1)), jnp.concatenate(outs, axis=1)


# ---------------------------------------------------------------------------
# Pure-JAX reference (follows the PyTorch module exactly, incl. conv biases).
# ---------------------------------------------------------------------------
def _reference(xyz, points, params, npoint, radius_list, nsample_list):
    S = npoint
    xyz_t = jnp.transpose(xyz, (0, 2, 1))
    pts_t = jnp.transpose(points, (0, 2, 1)) if points is not None else None
    new_xyz = index_points(xyz_t, farthest_point_sample(xyz_t, S))

    outs = []
    for i, radius in enumerate(radius_list):
        K = nsample_list[i]
        gidx = query_ball_point(radius, K, xyz_t, new_xyz)
        gxyz = index_points(xyz_t, gidx) - new_xyz[:, :, None, :]
        if pts_t is not None:
            grouped = jnp.concatenate([index_points(pts_t, gidx), gxyz], axis=-1)
        else:
            grouped = gxyz
        h = jnp.transpose(grouped, (0, 3, 2, 1))                       # [B, C, K, S]
        br = params[i]
        for w, b, g, be in zip(br['w'], br['b'], br['gamma'], br['beta']):
            h = jnp.einsum('co,bcks->boks', w, h,
                           precision=jax.lax.Precision.HIGHEST)
            h = h + b.reshape(1, -1, 1, 1)
            mu = jnp.mean(h, axis=(0, 2, 3), keepdims=True)
            var = jnp.mean((h - mu) ** 2, axis=(0, 2, 3), keepdims=True)
            h = ((h - mu) * jax.lax.rsqrt(var + _BN_EPS)
                 * g.reshape(1, -1, 1, 1) + be.reshape(1, -1, 1, 1))
            h = jnp.maximum(h, 0.0)
        outs.append(jnp.max(h, axis=2))                                # [B, C, S]
    return jnp.transpose(new_xyz, (0, 2, 1)), jnp.concatenate(outs, axis=1)


def _init_params(key, in_channel, mlp_list):
    params = []
    for mlp in mlp_list:
        last = in_channel + 3
        branch = {'w': [], 'b': [], 'gamma': [], 'beta': []}
        for c in mlp:
            key, k1, k2, k3, k4 = jax.random.split(key, 5)
            bound = 1.0 / float(np.sqrt(last))
            branch['w'].append(jax.random.uniform(k1, (last, c), jnp.float32,
                                                  -bound, bound))
            branch['b'].append(jax.random.uniform(k2, (1, c), jnp.float32,
                                                  -bound, bound))
            branch['gamma'].append(
                (1.0 + 0.1 * jax.random.normal(k3, (1, c))).astype(jnp.float32))
            branch['beta'].append(
                (0.1 * jax.random.normal(k4, (1, c))).astype(jnp.float32))
            last = c
        params.append(branch)
    return params


if __name__ == "__main__":
    key = jax.random.PRNGKey(0)
    kx, kp, kf = jax.random.split(key, 3)

    B, D, N = 2, 6, 64
    npoint = 56
    radius_list = [0.25, 0.45]
    nsample_list = [8, 16]
    mlp_list = [[16, 32], [16, 32, 64]]

    xyz = jax.random.uniform(kx, (B, 3, N), dtype=jnp.float32)
    points = jax.random.normal(kf, (B, D, N), dtype=jnp.float32)
    params = _init_params(kp, D, mlp_list)

    ref_xyz, ref_points = _reference(xyz, points, params, npoint,
                                     radius_list, nsample_list)

    # Exact-semantics check: f32 operands, small row tiles so the multi-tile,
    # group-padding/masking and Chan variance-combine paths are all exercised.
    f32_xyz, f32_points = pointnet_sa_msg(
        xyz, points, params, npoint, radius_list, nsample_list,
        compute_dtype=jnp.float32, max_rows_per_tile=256)
    f32_xyz, f32_points = jax.block_until_ready((f32_xyz, f32_points))
    np.testing.assert_allclose(np.asarray(f32_xyz), np.asarray(ref_xyz),
                               rtol=5e-4, atol=5e-4)
    np.testing.assert_allclose(np.asarray(f32_points), np.asarray(ref_points),
                               rtol=5e-4, atol=5e-4)

    # Fast path (default): bf16 MXU operands / bf16 activation caches with
    # VMEM-derived tile sizes.  Loose tolerance only accounts for bf16 rounding.
    new_xyz, new_points = pointnet_sa_msg(
        xyz, points, params, npoint, radius_list, nsample_list)
    new_xyz, new_points = jax.block_until_ready((new_xyz, new_points))
    np.testing.assert_allclose(np.asarray(new_xyz), np.asarray(ref_xyz),
                               rtol=5e-2, atol=1e-1)
    np.testing.assert_allclose(np.asarray(new_points), np.asarray(ref_points),
                               rtol=5e-2, atol=1e-1)

    assert new_xyz.shape == (B, 3, npoint)
    assert new_points.shape == (B, sum(m[-1] for m in mlp_list), npoint)
    print("KERNEL_OK")
</pallas_src>

<mosaic_0001>
module attributes {stable_mosaic.version = 11 : i64} {
  func.func @kernel(%arg0: i32, %arg1: memref<256x9xf32, #tpu.memory_space<vmem>>, %arg2: memref<9x16xf32, #tpu.memory_space<vmem>>, %arg3: memref<256x16xf32, #tpu.memory_space<vmem>>, %arg4: memref<1x1x16xf32, #tpu.memory_space<vmem>>, %arg5: memref<1x1x16xf32, #tpu.memory_space<vmem>>) attributes {dimension_semantics = [#tpu.dimension_semantics<parallel>], iteration_bounds = array<i64: 4>, scalar_prefetch = 0 : i64, scratch_operands = 0 : i64, tpu.core_type = #tpu.core_type<tc>, window_params = [{transform_indices = @transform_0, window_bounds = array<i64: 256, 9>}, {pipeline_mode = #tpu.pipeline_mode<synchronous>, transform_indices = @transform_1, window_bounds = array<i64: 9, 16>}, {transform_indices = @transform_2, window_bounds = array<i64: 256, 16>}, {transform_indices = @transform_3, window_bounds = array<i64: 1, 1, 16>}, {transform_indices = @transform_4, window_bounds = array<i64: 1, 1, 16>}]} {
    %c256_i32 = arith.constant 256 : i32
    %0 = arith.muli %arg0, %c256_i32 : i32
    %1 = tpu.iota {dimensions = array<i32: 0>} : vector<256x1xi32>
    %c896_i32 = arith.constant 896 : i32
    %2 = arith.subi %c896_i32, %0 : i32
    %3 = vector.broadcast %2 : i32 to vector<256x1xi32>
    %4 = arith.cmpi slt, %1, %3 : vector<256x1xi32>
    %c0 = arith.constant 0 : index
    %c0_0 = arith.constant 0 : index
    %5 = vector.load %arg1[%c0, %c0_0] : memref<256x9xf32, #tpu.memory_space<vmem>>, vector<256x9xf32>
    %c0_1 = arith.constant 0 : index
    %c0_2 = arith.constant 0 : index
    %6 = vector.load %arg2[%c0_1, %c0_2] : memref<9x16xf32, #tpu.memory_space<vmem>>, vector<9x16xf32>
    %cst = arith.constant dense<0.000000e+00> : vector<256x16xf32>
    %7 = tpu.matmul %5, %6, %cst {dimension_numbers = #tpu.dot_dimension_numbers<[1], [0], [0], [1], [0, 0, 1, 1], [], []>} : vector<256x9xf32>, vector<9x16xf32>, vector<256x16xf32> -> vector<256x16xf32>
    %c0_3 = arith.constant 0 : index
    %c0_4 = arith.constant 0 : index
    %8 = vector.load %arg3[%c0_3, %c0_4] : memref<256x16xf32, #tpu.memory_space<vmem>>, vector<256x16xf32>
    tpu.vector_store %arg3[%c0_3, %c0_4], %7 {strides = array<i32>} : memref<256x16xf32, #tpu.memory_space<vmem>>, vector<256x16xf32>,
    %c896_i32_5 = arith.constant 896 : i32
    %9 = arith.subi %c896_i32_5, %0 : i32
    %c256_i32_6 = arith.constant 256 : i32
    %10 = arith.minsi %9, %c256_i32_6 : i32
    %11 = arith.sitofp %10 : i32 to f32
    %cst_7 = arith.constant dense<0.000000e+00> : vector<16xf32>
    %12 = vector.multi_reduction <add>, %7, %cst_7 [0] : vector<256x16xf32> to vector<16xf32>
    %13 = vector.shape_cast %12 : vector<16xf32> to vector<1x16xf32>
    %14 = vector.broadcast %11 : f32 to vector<1x16xf32>
    %15 = arith.divf %13, %14 : vector<1x16xf32>
    %16 = vector.broadcast %15 : vector<1x16xf32> to vector<256x16xf32>
    %17 = arith.subf %7, %16 : vector<256x16xf32>
    %18 = arith.mulf %17, %17 : vector<256x16xf32>
    %cst_8 = arith.constant 0.000000e+00 : f32
    %19 = vector.shape_cast %4 : vector<256x1xi1> to vector<256x1xi1>
    %20 = vector.broadcast %19 : vector<256x1xi1> to vector<256x16xi1>
    %21 = vector.broadcast %cst_8 : f32 to vector<256x16xf32>
    %22 = arith.select %20, %18, %21 : vector<256x16xi1>, vector<256x16xf32>
    %23 = vector.shape_cast %13 : vector<1x16xf32> to vector<1x1x16xf32>
    %c0_9 = arith.constant 0 : index
    %c0_10 = arith.constant 0 : index
    %c0_11 = arith.constant 0 : index
    %24 = vector.load %arg4[%c0_9, %c0_10, %c0_11] : memref<1x1x16xf32, #tpu.memory_space<vmem>>, vector<1x1x16xf32>
    tpu.vector_store %arg4[%c0_9, %c0_10, %c0_11], %23 {strides = array<i32>} : memref<1x1x16xf32, #tpu.memory_space<vmem>>, vector<1x1x16xf32>,
    %cst_12 = arith.constant dense<0.000000e+00> : vector<16xf32>
    %25 = vector.multi_reduction <add>, %22, %cst_12 [0] : vector<256x16xf32> to vector<16xf32>
    %26 = vector.shape_cast %25 : vector<16xf32> to vector<1x16xf32>
    %27 = vector.shape_cast %26 : vector<1x16xf32> to vector<1x1x16xf32>
    %c0_13 = arith.constant 0 : index
    %c0_14 = arith.constant 0 : index
    %c0_15 = arith.constant 0 : index
    %28 = vector.load %arg5[%c0_13, %c0_14, %c0_15] : memref<1x1x16xf32, #tpu.memory_space<vmem>>, vector<1x1x16xf32>
    tpu.vector_store %arg5[%c0_13, %c0_14, %c0_15], %27 {strides = array<i32>} : memref<1x1x16xf32, #tpu.memory_space<vmem>>, vector<1x1x16xf32>,
    return
  }
  func.func @transform_0(%arg0: i32) -> (i32, i32) {
    %c0_i32 = arith.constant 0 : i32
    %c0_i32_0 = arith.constant 0 : i32
    return %arg0, %c0_i32 : i32, i32
  }
  func.func @transform_1(%arg0: i32) -> (i32, i32) {
    %c0_i32 = arith.constant 0 : i32
    %c0_i32_0 = arith.constant 0 : i32
    %c0_i32_1 = arith.constant 0 : i32
    return %c0_i32, %c0_i32_0 : i32, i32
  }
  func.func @transform_2(%arg0: i32) -> (i32, i32) {
    %c0_i32 = arith.constant 0 : i32
    %c0_i32_0 = arith.constant 0 : i32
    return %arg0, %c0_i32 : i32, i32
  }
  func.func @transform_3(%arg0: i32) -> (i32, i32, i32) {
    %c0_i32 = arith.constant 0 : i32
    %c0_i32_0 = arith.constant 0 : i32
    %c0_i32_1 = arith.constant 0 : i32
    return %arg0, %c0_i32, %c0_i32_0 : i32, i32, i32
  }
  func.func @transform_4(%arg0: i32) -> (i32, i32, i32) {
    %c0_i32 = arith.constant 0 : i32
    %c0_i32_0 = arith.constant 0 : i32
    %c0_i32_1 = arith.constant 0 : i32
    return %arg0, %c0_i32, %c0_i32_0 : i32, i32, i32
  }
}

</mosaic_0001>

<llo_original>
// kernel: tpu_custom_call.1
$region0: #{tpu_custom_call.1}
  #allocation0 [shape = 'u32[]', space=smem, size = 0x4, offset = 0x4, fixed_abs, tag = 'smem constant byte address 0x4 - core index']
  #allocation1 [shape = 'u32[72,128]{1,0:T(1,128)}', space=vmem, size = 0x9000, scoped, tag = 'internal scratch']
  %s0 = inlined_call_operand.vmem [shape: f32[1024,9], index: 0, kind: input, shape index: {}]
  %s1 = inlined_call_operand.vmem [shape: f32[9,16], index: 1, kind: input, shape index: {}]
  %s2 = inlined_call_operand.vmem [shape: f32[1024,16], index: 2, kind: output, shape index: {0}]
  %s3 = inlined_call_operand.hbm [shape: f32[4,1,16], index: 3, kind: output, shape index: {1}]
  %s4 = inlined_call_operand.hbm [shape: f32[4,1,16], index: 4, kind: output, shape index: {2}]
  %5 = xla_tuple %s2, %s3, %s4
  %s6 = sld [smem:[#allocation0]]
  $region57: #{tpu_custom_call.1} parent=0
    _
  %s8 = ssub.s32 1, %s6
  %s9 = scalar_select 0, %s8, %s6
  $region1: #{tpu_custom_call.1} parent=0
    #allocation2 [shape = 'u8[1024]{0}', space=vmem, size = 0x400, scoped, tag = 'output window, operand 1']
    #allocation3 [shape = 's32[2]{0}', space=sflag, size = 0x8, scoped, tag = 'scoped memory for tpu_custom_call.1']
    #allocation4 [shape = 'u8[1024]{0}', space=vmem, size = 0x400, scoped, tag = 'output window, operand 2']
    #allocation5 [shape = 's32[2]{0}', space=sflag, size = 0x8, scoped, tag = 'scoped memory for tpu_custom_call.1']
    %10 = vsyncpa [#allocation3], 0
    %s11 = scalar_lea.sflag [#allocation3], 1
    %12 = vsyncpa %s11, 0
    %13 = vsyncpa [#allocation5], 0
    %s14 = scalar_lea.sflag [#allocation5], 1
    %15 = vsyncpa %s14, 0
    loop: start=0, step=1, limit=6
    $region2: #{tpu_custom_call.1} parent=1 // loop_pre_header
      _
    $region3: #{tpu_custom_call.1} parent=1 // loop_header
      %s17 = sphi 0, %s21
      %p18 = scmp.ge.s32.totalorder %s17, 6
      %s27 = sphi 0, %s29
      %s30 = sphi 0, %s27
      %s31 = sphi 0, %s30
      %s47 = sphi 0, %s31
      %s51 = sphi 0, %s51
      %s53 = sphi 0, %s51
      %s54 = sphi 0, %s53
      %s68 = sphi 0, %s54
      %s74 = sphi 0, %s76
      %s77 = sphi 0, %s74
      %s78 = sphi 0, %s77
      %s94 = sphi 0, %s78
      %s100 = sphi 0, %s102
      %s103 = sphi 0, %s100
      %s104 = sphi 0, %s103
      %s120 = sphi 0, %s104
      %s126 = sphi 0, %s128
      %s129 = sphi 0, %s126
      %s130 = sphi 0, %s129
      %s146 = sphi 0, %s130
    $region4: #{tpu_custom_call.1} parent=1 // loop_header_branch
      %20 = sbr.rel (%p18) target = $region8
    $region5: #{tpu_custom_call.1} parent=1 // loop_body
      %s22 = ssub.s32 %s17, 1
      %s23 = ssub.s32 %s17, 2
      %s24 = sadd.s32 %s17, 1
      %s25 = ssub.s32 %s17, %s24
      %p26 = scmp.eq.s32.totalorder %s25, 0
      %s28 = sadd.s32 %s27, 1
      %s29 = scalar_select %p26, %s27, %s28
      %p32 = pneg %p26
      %p33 = scmp.eq.s32.totalorder %s17, 3
      %p34 = por %p32, %p33
      %p35 = scmp.ne.s32.totalorder %s27, %s30
      %p36 = scmp.eq.s32.totalorder %s17, 0
      %p37 = por %p35, %p36
      %p38 = scmp.ne.s32.totalorder %s27, %s30
      %p39 = scmp.eq.s32.totalorder %s22, 3
      %p40 = por %p38, %p39
      %p41 = scmp.ne.s32.totalorder %s30, %s31
      %p42 = scmp.eq.s32.totalorder %s22, 0
      %p43 = por %p41, %p42
      %p44 = scmp.ne.s32.totalorder %s30, %s31
      %p45 = scmp.eq.s32.totalorder %s23, 3
      %p46 = por %p44, %p45
      %p48 = scmp.ne.s32.totalorder %s31, %s47
      %p49 = scmp.eq.s32.totalorder %s23, 0
      %p50 = por %p48, %p49
      %s52 = sadd.s32 %s51, 1
      %p55 = scmp.eq.s32.totalorder %s17, 3
      %p56 = scmp.ne.s32.totalorder %s51, %s53
      %p57 = scmp.eq.s32.totalorder %s17, 0
      %p58 = por %p56, %p57
      %p59 = scmp.ne.s32.totalorder %s51, %s53
      %p60 = scmp.eq.s32.totalorder %s22, 3
      %p61 = por %p59, %p60
      %p62 = scmp.ne.s32.totalorder %s53, %s54
      %p63 = scmp.eq.s32.totalorder %s22, 0
      %p64 = por %p62, %p63
      %p65 = scmp.ne.s32.totalorder %s53, %s54
      %p66 = scmp.eq.s32.totalorder %s23, 3
      %p67 = por %p65, %p66
      %p69 = scmp.ne.s32.totalorder %s54, %s68
      %p70 = scmp.eq.s32.totalorder %s23, 0
      %p71 = por %p69, %p70
      %s72 = ssub.s32 %s17, %s24
      %p73 = scmp.eq.s32.totalorder %s72, 0
      %s75 = sadd.s32 %s74, 1
      %s76 = scalar_select %p73, %s74, %s75
      %p79 = pneg %p73
      %p80 = scmp.eq.s32.totalorder %s17, 3
      %p81 = por %p79, %p80
      %p82 = scmp.ne.s32.totalorder %s74, %s77
      %p83 = scmp.eq.s32.totalorder %s17, 0
      %p84 = por %p82, %p83
      %p85 = scmp.ne.s32.totalorder %s74, %s77
      %p86 = scmp.eq.s32.totalorder %s22, 3
      %p87 = por %p85, %p86
      %p88 = scmp.ne.s32.totalorder %s77, %s78
      %p89 = scmp.eq.s32.totalorder %s22, 0
      %p90 = por %p88, %p89
      %p91 = scmp.ne.s32.totalorder %s77, %s78
      %p92 = scmp.eq.s32.totalorder %s23, 3
      %p93 = por %p91, %p92
      %p95 = scmp.ne.s32.totalorder %s78, %s94
      %p96 = scmp.eq.s32.totalorder %s23, 0
      %p97 = por %p95, %p96
      %s98 = ssub.s32 %s17, %s24
      %p99 = scmp.eq.s32.totalorder %s98, 0
      %s101 = sadd.s32 %s100, 1
      %s102 = scalar_select %p99, %s100, %s101
      %p105 = pneg %p99
      %p106 = scmp.eq.s32.totalorder %s17, 3
      %p107 = por %p105, %p106
      %p108 = scmp.ne.s32.totalorder %s100, %s103
      %p109 = scmp.eq.s32.totalorder %s17, 0
      %p110 = por %p108, %p109
      %p111 = scmp.ne.s32.totalorder %s100, %s103
      %p112 = scmp.eq.s32.totalorder %s22, 3
      %p113 = por %p111, %p112
      %p114 = scmp.ne.s32.totalorder %s103, %s104
      %p115 = scmp.eq.s32.totalorder %s22, 0
      %p116 = por %p114, %p115
      %p117 = scmp.ne.s32.totalorder %s103, %s104
      %p118 = scmp.eq.s32.totalorder %s23, 3
      %p119 = por %p117, %p118
      %p121 = scmp.ne.s32.totalorder %s104, %s120
      %p122 = scmp.eq.s32.totalorder %s23, 0
      %p123 = por %p121, %p122
      %s124 = ssub.s32 %s17, %s24
      %p125 = scmp.eq.s32.totalorder %s124, 0
      %s127 = sadd.s32 %s126, 1
      %s128 = scalar_select %p125, %s126, %s127
      %p131 = pneg %p125
      %p132 = scmp.eq.s32.totalorder %s17, 3
      %p133 = por %p131, %p132
      %p134 = scmp.ne.s32.totalorder %s126, %s129
      %p135 = scmp.eq.s32.totalorder %s17, 0
      %p136 = por %p134, %p135
      %p137 = scmp.ne.s32.totalorder %s126, %s129
      %p138 = scmp.eq.s32.totalorder %s22, 3
      %p139 = por %p137, %p138
      %p140 = scmp.ne.s32.totalorder %s129, %s130
      %p141 = scmp.eq.s32.totalorder %s22, 0
      %p142 = por %p140, %p141
      %p143 = scmp.ne.s32.totalorder %s129, %s130
      %p144 = scmp.eq.s32.totalorder %s23, 3
      %p145 = por %p143, %p144
      %p147 = scmp.ne.s32.totalorder %s130, %s146
      %p148 = scmp.eq.s32.totalorder %s23, 0
      %p149 = por %p147, %p148
      %p150 = scmp.le.s32.totalorder 1, %s17
      %p151 = scmp.lt.s32.totalorder %s17, 5
      %p152 = pnand %p150, %p151
      %p153 = pneg %p152
      // Predicated region
      $region9: #{tpu_custom_call.1} parent=5 // pred_check
        _
      $region10: #{tpu_custom_call.1} parent=5 // pred_check_branch
        %155 = sbr.rel (%p152) target = $region12
      $region11: #{tpu_custom_call.1} parent=5 // pred_region
        %s156 = ssub.s32 %s17, 1
        // Predicated region
        $region13: #{tpu_custom_call.1} parent=11 // pred_check
          %p157 = pneg %p64
        $region14: #{tpu_custom_call.1} parent=11 // pred_check_branch
          %159 = sbr.rel (%p157) target = $region16
        $region15: #{tpu_custom_call.1} parent=11 // pred_region
          _
        $region16: #{tpu_custom_call.1} parent=11 // pred_fallthru
          _
      $region12: #{tpu_custom_call.1} parent=5 // pred_fallthru
        _
      %p160 = scmp.lt.s32.totalorder %s17, 4
      // Predicated region
      $region17: #{tpu_custom_call.1} parent=5 // pred_check
        %p161 = pneg %p160
      $region18: #{tpu_custom_call.1} parent=5 // pred_check_branch
        %163 = sbr.rel (%p161) target = $region20
      $region19: #{tpu_custom_call.1} parent=5 // pred_region
        // Predicated region
        $region21: #{tpu_custom_call.1} parent=19 // pred_check
          %p164 = pneg %p37
        $region22: #{tpu_custom_call.1} parent=19 // pred_check_branch
          %166 = sbr.rel (%p164) target = $region24
        $region23: #{tpu_custom_call.1} parent=19 // pred_region
          %s167 = smul.u32 32, %s17
          %p168 = scmp.lt.s32.totalorder %s167, 127
          %s169 = scalar_select %p168, %s167, 127
          %s170 = smul.addr %s169, 8
          %s171 = scalar_lea.vmem %s0, %s170
          %s172 = smul.u32 32, %s17
        $region24: #{tpu_custom_call.1} parent=19 // pred_fallthru
          _
      $region20: #{tpu_custom_call.1} parent=5 // pred_fallthru
        _
      %p173 = scmp.le.s32.totalorder 1, %s17
      %p174 = scmp.lt.s32.totalorder %s17, 5
      %p175 = pnand %p173, %p174
      %p176 = pneg %p175
      // Predicated region
      $region25: #{tpu_custom_call.1} parent=5 // pred_check
        _
      $region26: #{tpu_custom_call.1} parent=5 // pred_check_branch
        %178 = sbr.rel (%p175) target = $region28
      $region27: #{tpu_custom_call.1} parent=5 // pred_region
        %s179 = ssub.s32 %s17, 1
        %s180 = smul.u32 32, %s22
        %p181 = scmp.lt.s32.totalorder %s180, 127
        %s182 = scalar_select %p181, %s180, 127
        %s183 = smul.addr %s182, 8
        %s184 = scalar_lea.vmem %s0, %s183
        %p185 = pneg %p43
        %p186 = pneg %p40
        %p187 = pneg %p64
        %p188 = pneg %p61
        %p189 = pneg %p90
        %p190 = pneg %p87
        %s191 = smul.u32 32, %s22
        %p192 = scmp.lt.s32.totalorder %s191, 127
        %s193 = scalar_select %p192, %s191, 127
        %s194 = smul.addr %s193, 8
        %s195 = scalar_lea.vmem %s2, %s194
        %p196 = pneg %p116
        %p197 = pneg %p113
        %s198 = sand.u32 %s103, 1
        %s199 = scalar_lea.sflag [#allocation3], %s198
        %s200 = sand.u32 %s103, 1
        %s201 = scalar_lea.vmem [#allocation2], %s200
        %p202 = pneg %p142
        %p203 = pneg %p139
        %s204 = sand.u32 %s129, 1
        %s205 = scalar_lea.sflag [#allocation5], %s204
        %s206 = sand.u32 %s129, 1
        %s207 = scalar_lea.vmem [#allocation4], %s206
        %s208 = smul.u32 32, %s22
        %p209 = scmp.lt.s32.totalorder %s208, 127
        %s210 = scalar_select %p209, %s208, 127
        %s211 = smul.addr %s210, 8
        %s212 = scalar_lea.vmem %s0, %s211
        %s213 = smul.u32 32, %s22
        %s214 = smul.u32 32, %s22
        %p215 = scmp.lt.s32.totalorder %s214, 127
        %s216 = scalar_select %p215, %s214, 127
        %s217 = smul.addr %s216, 8
        %s218 = scalar_lea.vmem %s2, %s217
        %s219 = smul.u32 32, %s22
        %s220 = smul.u32 %s22, 256
        %v221 = vlaneseq
        %v222 = vshrl.u32 %v221, 7
        %v223 = vadd.s32 %v222, 8
        %v224 = vadd.s32 %v222, 16
        %v225 = vadd.s32 %v222, 24
        %v226 = vadd.s32 %v222, 32
        %v227 = vadd.s32 %v222, 40
        %v228 = vadd.s32 %v222, 48
        %v229 = vadd.s32 %v222, 56
        %v230 = vadd.s32 %v222, 64
        %v231 = vadd.s32 %v222, 72
        %v232 = vadd.s32 %v222, 80
        %v233 = vadd.s32 %v222, 88
        %v234 = vadd.s32 %v222, 96
        %v235 = vadd.s32 %v222, 104
        %v236 = vadd.s32 %v222, 112
        %v237 = vadd.s32 %v222, 120
        %v238 = vadd.s32 %v222, 128
        %v239 = vadd.s32 %v222, 136
        %v240 = vadd.s32 %v222, 144
        %v241 = vadd.s32 %v222, 152
        %v242 = vadd.s32 %v222, 160
        %v243 = vadd.s32 %v222, 168
        %v244 = vadd.s32 %v222, 176
        %v245 = vadd.s32 %v222, 184
        %v246 = vadd.s32 %v222, 192
        %v247 = vadd.s32 %v222, 200
        %v248 = vadd.s32 %v222, 208
        %v249 = vadd.s32 %v222, 216
        %v250 = vadd.s32 %v222, 224
        %v251 = vadd.s32 %v222, 232
        %v252 = vadd.s32 %v222, 240
        %v253 = vadd.s32 %v222, 248
        %s254 = ssub.s32 896, %s220
        %v255 = vstv %s254
        %vm256 = vcmp.lt.s32.totalorder %v222, %v255
        %vm257 = vcmp.lt.s32.totalorder %v223, %v255
        %vm258 = vcmp.lt.s32.totalorder %v224, %v255
        %vm259 = vcmp.lt.s32.totalorder %v225, %v255
        %vm260 = vcmp.lt.s32.totalorder %v226, %v255
        %vm261 = vcmp.lt.s32.totalorder %v227, %v255
        %vm262 = vcmp.lt.s32.totalorder %v228, %v255
        %vm263 = vcmp.lt.s32.totalorder %v229, %v255
        %vm264 = vcmp.lt.s32.totalorder %v230, %v255
        %vm265 = vcmp.lt.s32.totalorder %v231, %v255
        %vm266 = vcmp.lt.s32.totalorder %v232, %v255
        %vm267 = vcmp.lt.s32.totalorder %v233, %v255
        %vm268 = vcmp.lt.s32.totalorder %v234, %v255
        %vm269 = vcmp.lt.s32.totalorder %v235, %v255
        %vm270 = vcmp.lt.s32.totalorder %v236, %v255
        %vm271 = vcmp.lt.s32.totalorder %v237, %v255
        %vm272 = vcmp.lt.s32.totalorder %v238, %v255
        %vm273 = vcmp.lt.s32.totalorder %v239, %v255
        %vm274 = vcmp.lt.s32.totalorder %v240, %v255
        %vm275 = vcmp.lt.s32.totalorder %v241, %v255
        %vm276 = vcmp.lt.s32.totalorder %v242, %v255
        %vm277 = vcmp.lt.s32.totalorder %v243, %v255
        %vm278 = vcmp.lt.s32.totalorder %v244, %v255
        %vm279 = vcmp.lt.s32.totalorder %v245, %v255
        %vm280 = vcmp.lt.s32.totalorder %v246, %v255
        %vm281 = vcmp.lt.s32.totalorder %v247, %v255
        %vm282 = vcmp.lt.s32.totalorder %v248, %v255
        %vm283 = vcmp.lt.s32.totalorder %v249, %v255
        %vm284 = vcmp.lt.s32.totalorder %v250, %v255
        %vm285 = vcmp.lt.s32.totalorder %v251, %v255
        %vm286 = vcmp.lt.s32.totalorder %v252, %v255
        %vm287 = vcmp.lt.s32.totalorder %v253, %v255
        %v288 = vld [vmem:[%s212] sm:$0xff]
        %v289 = vld [vmem:[%s212 + $0x8] sm:$0xff]
        %v290 = vld [vmem:[%s212 + $0x10] sm:$0xff]
        %v291 = vld [vmem:[%s212 + $0x18] sm:$0xff]
        %v292 = vld [vmem:[%s212 + $0x20] sm:$0xff]
        %v293 = vld [vmem:[%s212 + $0x28] sm:$0xff]
        %v294 = vld [vmem:[%s212 + $0x30] sm:$0xff]
        %v295 = vld [vmem:[%s212 + $0x38] sm:$0xff]
        %v296 = vld [vmem:[%s212 + $0x40] sm:$0xff]
        %v297 = vld [vmem:[%s212 + $0x48] sm:$0xff]
        %v298 = vld [vmem:[%s212 + $0x50] sm:$0xff]
        %v299 = vld [vmem:[%s212 + $0x58] sm:$0xff]
        %v300 = vld [vmem:[%s212 + $0x60] sm:$0xff]
        %v301 = vld [vmem:[%s212 + $0x68] sm:$0xff]
        %v302 = vld [vmem:[%s212 + $0x70] sm:$0xff]
        %v303 = vld [vmem:[%s212 + $0x78] sm:$0xff]
        %v304 = vld [vmem:[%s212 + $0x80] sm:$0xff]
        %v305 = vld [vmem:[%s212 + $0x88] sm:$0xff]
        %v306 = vld [vmem:[%s212 + $0x90] sm:$0xff]
        %v307 = vld [vmem:[%s212 + $0x98] sm:$0xff]
        %v308 = vld [vmem:[%s212 + $0xa0] sm:$0xff]
        %v309 = vld [vmem:[%s212 + $0xa8] sm:$0xff]
        %v310 = vld [vmem:[%s212 + $0xb0] sm:$0xff]
        %v311 = vld [vmem:[%s212 + $0xb8] sm:$0xff]
        %v312 = vld [vmem:[%s212 + $0xc0] sm:$0xff]
        %v313 = vld [vmem:[%s212 + $0xc8] sm:$0xff]
        %v314 = vld [vmem:[%s212 + $0xd0] sm:$0xff]
        %v315 = vld [vmem:[%s212 + $0xd8] sm:$0xff]
        %v316 = vld [vmem:[%s212 + $0xe0] sm:$0xff]
        %v317 = vld [vmem:[%s212 + $0xe8] sm:$0xff]
        %v318 = vld [vmem:[%s212 + $0xf0] sm:$0xff]
        %v319 = vld [vmem:[%s212 + $0xf8] sm:$0xff]
        %v320 = vld [vmem:[%s1] sm:$0xff]
        %v321 = vld [vmem:[%s1 + $0x8] sm:$0x1]
        %vm322 = vcmask 72704
        %v324 = vsel %vm322, %v288, 0
        %v327 = vsel %vm322, %v289, 0
        %v330 = vsel %vm322, %v290, 0
        %v333 = vsel %vm322, %v291, 0
        %v336 = vsel %vm322, %v292, 0
        %v339 = vsel %vm322, %v293, 0
        %v342 = vsel %vm322, %v294, 0
        %v345 = vsel %vm322, %v295, 0
        %v348 = vsel %vm322, %v296, 0
        %v351 = vsel %vm322, %v297, 0
        %v354 = vsel %vm322, %v298, 0
        %v357 = vsel %vm322, %v299, 0
        %v360 = vsel %vm322, %v300, 0
        %v363 = vsel %vm322, %v301, 0
        %v366 = vsel %vm322, %v302, 0
        %v369 = vsel %vm322, %v303, 0
        %v372 = vsel %vm322, %v304, 0
        %v375 = vsel %vm322, %v305, 0
        %v378 = vsel %vm322, %v306, 0
        %v381 = vsel %vm322, %v307, 0
        %v384 = vsel %vm322, %v308, 0
        %v387 = vsel %vm322, %v309, 0
        %v390 = vsel %vm322, %v310, 0
        %v393 = vsel %vm322, %v311, 0
        %v396 = vsel %vm322, %v312, 0
        %v399 = vsel %vm322, %v313, 0
        %v402 = vsel %vm322, %v314, 0
        %v405 = vsel %vm322, %v315, 0
        %v408 = vsel %vm322, %v316, 0
        %v411 = vsel %vm322, %v317, 0
        %v414 = vsel %vm322, %v318, 0
        %v417 = vsel %vm322, %v319, 0
        %vm419 = vcmask 1040384
        %v421 = vsel %vm419, %v321, 0
        %423 = vmatpush.msra.mxu0 0.0
        %424 = vmatpush.msra.mxu0 0.0
        %425 = vmatpush.msra.mxu0 0.0
        %426 = vmatpush.msra.mxu0 0.0
        %427 = vmatpush.msra.mxu0 0.0
        %428 = vmatpush.msra.mxu0 0.0
        %429 = vmatpush.msra.mxu0 0.0
        %430 = vmatpush.msra.mxu0 0.0
        %431 = vmatpush.msra.mxu0 0.0
        %432 = vmatpush.msra.mxu0 0.0
        %433 = vmatpush.msra.mxu0 0.0
        %434 = vmatpush.msra.mxu0 0.0
        %435 = vmatpush.msra.mxu0 0.0
        %436 = vmatpush.msra.mxu0 0.0
        %437 = vmatpush.msra.mxu0 %v421
        %438 = vmatpush.msra.mxu0 %v320
        %439 = vmatmul.f32.gmra.mxu0 %v324
        %v440 = vpop.f32.mrf.mxu0
        %v441 = vadd.f32 0.0, %v440
        %442 = vmatmul.f32.gmra.mxu0 %v327
        %v443 = vpop.f32.mrf.mxu0
        %v444 = vadd.f32 0.0, %v443
        %445 = vmatmul.f32.gmra.mxu0 %v330
        %v446 = vpop.f32.mrf.mxu0
        %v447 = vadd.f32 0.0, %v446
        %448 = vmatmul.f32.gmra.mxu0 %v333
        %v449 = vpop.f32.mrf.mxu0
        %v450 = vadd.f32 0.0, %v449
        %451 = vmatmul.f32.gmra.mxu0 %v336
        %v452 = vpop.f32.mrf.mxu0
        %v453 = vadd.f32 0.0, %v452
        %454 = vmatmul.f32.gmra.mxu0 %v339
        %v455 = vpop.f32.mrf.mxu0
        %v456 = vadd.f32 0.0, %v455
        %457 = vmatmul.f32.gmra.mxu0 %v342
        %v458 = vpop.f32.mrf.mxu0
        %v459 = vadd.f32 0.0, %v458
        %460 = vmatmul.f32.gmra.mxu0 %v345
        %v461 = vpop.f32.mrf.mxu0
        %v462 = vadd.f32 0.0, %v461
        %463 = vmatmul.f32.gmra.mxu0 %v348
        %v464 = vpop.f32.mrf.mxu0
        %v465 = vadd.f32 0.0, %v464
        %466 = vmatmul.f32.gmra.mxu0 %v351
        %v467 = vpop.f32.mrf.mxu0
        %v468 = vadd.f32 0.0, %v467
        %469 = vmatmul.f32.gmra.mxu0 %v354
        %v470 = vpop.f32.mrf.mxu0
        %v471 = vadd.f32 0.0, %v470
        %472 = vmatmul.f32.gmra.mxu0 %v357
        %v473 = vpop.f32.mrf.mxu0
        %v474 = vadd.f32 0.0, %v473
        %475 = vmatmul.f32.gmra.mxu0 %v360
        %v476 = vpop.f32.mrf.mxu0
        %v477 = vadd.f32 0.0, %v476
        %478 = vmatmul.f32.gmra.mxu0 %v363
        %v479 = vpop.f32.mrf.mxu0
        %v480 = vadd.f32 0.0, %v479
        %481 = vmatmul.f32.gmra.mxu0 %v366
        %v482 = vpop.f32.mrf.mxu0
        %v483 = vadd.f32 0.0, %v482
        %484 = vmatmul.f32.gmra.mxu0 %v369
        %v485 = vpop.f32.mrf.mxu0
        %v486 = vadd.f32 0.0, %v485
        %487 = vmatmul.f32.gmra.mxu0 %v372
        %v488 = vpop.f32.mrf.mxu0
        %v489 = vadd.f32 0.0, %v488
        %490 = vmatmul.f32.gmra.mxu0 %v375
        %v491 = vpop.f32.mrf.mxu0
        %v492 = vadd.f32 0.0, %v491
        %493 = vmatmul.f32.gmra.mxu0 %v378
        %v494 = vpop.f32.mrf.mxu0
        %v495 = vadd.f32 0.0, %v494
        %496 = vmatmul.f32.gmra.mxu0 %v381
        %v497 = vpop.f32.mrf.mxu0
        %v498 = vadd.f32 0.0, %v497
        %499 = vmatmul.f32.gmra.mxu0 %v384
        %v500 = vpop.f32.mrf.mxu0
        %v501 = vadd.f32 0.0, %v500
        %502 = vmatmul.f32.gmra.mxu0 %v387
        %v503 = vpop.f32.mrf.mxu0
        %v504 = vadd.f32 0.0, %v503
        %505 = vmatmul.f32.gmra.mxu0 %v390
        %v506 = vpop.f32.mrf.mxu0
        %v507 = vadd.f32 0.0, %v506
        %508 = vmatmul.f32.gmra.mxu0 %v393
        %v509 = vpop.f32.mrf.mxu0
        %v510 = vadd.f32 0.0, %v509
        %511 = vmatmul.f32.gmra.mxu0 %v396
        %v512 = vpop.f32.mrf.mxu0
        %v513 = vadd.f32 0.0, %v512
        %514 = vmatmul.f32.gmra.mxu0 %v399
        %v515 = vpop.f32.mrf.mxu0
        %v516 = vadd.f32 0.0, %v515
        %517 = vmatmul.f32.gmra.mxu0 %v402
        %v518 = vpop.f32.mrf.mxu0
        %v519 = vadd.f32 0.0, %v518
        %520 = vmatmul.f32.gmra.mxu0 %v405
        %v521 = vpop.f32.mrf.mxu0
        %v522 = vadd.f32 0.0, %v521
        %523 = vmatmul.f32.gmra.mxu0 %v408
        %v524 = vpop.f32.mrf.mxu0
        %v525 = vadd.f32 0.0, %v524
        %526 = vmatmul.f32.gmra.mxu0 %v411
        %v527 = vpop.f32.mrf.mxu0
        %v528 = vadd.f32 0.0, %v527
        %529 = vmatmul.f32.gmra.mxu0 %v414
        %v530 = vpop.f32.mrf.mxu0
        %v531 = vadd.f32 0.0, %v530
        %532 = vmatmul.f32.gmra.mxu0 %v417
        %v533 = vpop.f32.mrf.mxu0
        %v534 = vadd.f32 0.0, %v533
        %535 = vdwg.mxu0
        %vm536 = vcmask 130048
        %537 = vst.msk [vmem:[%s218] sm:$0xff] %vm536, %v441
        %538 = vst.msk [vmem:[%s218 + $0x8] sm:$0xff] %vm536, %v444
        %539 = vst.msk [vmem:[%s218 + $0x10] sm:$0xff] %vm536, %v447
        %540 = vst.msk [vmem:[%s218 + $0x18] sm:$0xff] %vm536, %v450
        %541 = vst.msk [vmem:[%s218 + $0x20] sm:$0xff] %vm536, %v453
        %542 = vst.msk [vmem:[%s218 + $0x28] sm:$0xff] %vm536, %v456
        %543 = vst.msk [vmem:[%s218 + $0x30] sm:$0xff] %vm536, %v459
        %544 = vst.msk [vmem:[%s218 + $0x38] sm:$0xff] %vm536, %v462
        %545 = vst.msk [vmem:[%s218 + $0x40] sm:$0xff] %vm536, %v465
        %546 = vst.msk [vmem:[%s218 + $0x48] sm:$0xff] %vm536, %v468
        %547 = vst.msk [vmem:[%s218 + $0x50] sm:$0xff] %vm536, %v471
        %548 = vst.msk [vmem:[%s218 + $0x58] sm:$0xff] %vm536, %v474
        %549 = vst.msk [vmem:[%s218 + $0x60] sm:$0xff] %vm536, %v477
        %550 = vst.msk [vmem:[%s218 + $0x68] sm:$0xff] %vm536, %v480
        %551 = vst.msk [vmem:[%s218 + $0x70] sm:$0xff] %vm536, %v483
        %552 = vst.msk [vmem:[%s218 + $0x78] sm:$0xff] %vm536, %v486
        %553 = vst.msk [vmem:[%s218 + $0x80] sm:$0xff] %vm536, %v489
        %554 = vst.msk [vmem:[%s218 + $0x88] sm:$0xff] %vm536, %v492
        %555 = vst.msk [vmem:[%s218 + $0x90] sm:$0xff] %vm536, %v495
        %556 = vst.msk [vmem:[%s218 + $0x98] sm:$0xff] %vm536, %v498
        %557 = vst.msk [vmem:[%s218 + $0xa0] sm:$0xff] %vm536, %v501
        %558 = vst.msk [vmem:[%s218 + $0xa8] sm:$0xff] %vm536, %v504
        %559 = vst.msk [vmem:[%s218 + $0xb0] sm:$0xff] %vm536, %v507
        %560 = vst.msk [vmem:[%s218 + $0xb8] sm:$0xff] %vm536, %v510
        %561 = vst.msk [vmem:[%s218 + $0xc0] sm:$0xff] %vm536, %v513
        %562 = vst.msk [vmem:[%s218 + $0xc8] sm:$0xff] %vm536, %v516
        %563 = vst.msk [vmem:[%s218 + $0xd0] sm:$0xff] %vm536, %v519
        %564 = vst.msk [vmem:[%s218 + $0xd8] sm:$0xff] %vm536, %v522
        %565 = vst.msk [vmem:[%s218 + $0xe0] sm:$0xff] %vm536, %v525
        %566 = vst.msk [vmem:[%s218 + $0xe8] sm:$0xff] %vm536, %v528
        %567 = vst.msk [vmem:[%s218 + $0xf0] sm:$0xff] %vm536, %v531
        %568 = vst.msk [vmem:[%s218 + $0xf8] sm:$0xff] %vm536, %v534
        %p569 = scmp.lt.s32.totalorder %s254, 256
        %s570 = scalar_select %p569, %s254, 256
        %s571 = scvt.s32.f32 %s570
        %v572 = vsel %vm536, %v441, 0.0
        %v573 = vsel %vm536, %v444, 0.0
        %v574 = vadd.f32 %v572, %v573
        %v575 = vsel %vm536, %v447, 0.0
        %v576 = vadd.f32 %v574, %v575
        %v577 = vsel %vm536, %v450, 0.0
        %v578 = vadd.f32 %v576, %v577
        %v579 = vsel %vm536, %v453, 0.0
        %v580 = vadd.f32 %v578, %v579
        %v581 = vsel %vm536, %v456, 0.0
        %v582 = vadd.f32 %v580, %v581
        %v583 = vsel %vm536, %v459, 0.0
        %v584 = vadd.f32 %v582, %v583
        %v585 = vsel %vm536, %v462, 0.0
        %v586 = vadd.f32 %v584, %v585
        %v587 = vsel %vm536, %v465, 0.0
        %v588 = vadd.f32 %v586, %v587
        %v589 = vsel %vm536, %v468, 0.0
        %v590 = vadd.f32 %v588, %v589
        %v591 = vsel %vm536, %v471, 0.0
        %v592 = vadd.f32 %v590, %v591
        %v593 = vsel %vm536, %v474, 0.0
        %v594 = vadd.f32 %v592, %v593
        %v595 = vsel %vm536, %v477, 0.0
        %v596 = vadd.f32 %v594, %v595
        %v597 = vsel %vm536, %v480, 0.0
        %v598 = vadd.f32 %v596, %v597
        %v599 = vsel %vm536, %v483, 0.0
        %v600 = vadd.f32 %v598, %v599
        %v601 = vsel %vm536, %v486, 0.0
        %v602 = vadd.f32 %v600, %v601
        %v603 = vsel %vm536, %v489, 0.0
        %v604 = vadd.f32 %v602, %v603
        %v605 = vsel %vm536, %v492, 0.0
        %v606 = vadd.f32 %v604, %v605
        %v607 = vsel %vm536, %v495, 0.0
        %v608 = vadd.f32 %v606, %v607
        %v609 = vsel %vm536, %v498, 0.0
        %v610 = vadd.f32 %v608, %v609
        %v611 = vsel %vm536, %v501, 0.0
        %v612 = vadd.f32 %v610, %v611
        %v613 = vsel %vm536, %v504, 0.0
        %v614 = vadd.f32 %v612, %v613
        %v615 = vsel %vm536, %v507, 0.0
        %v616 = vadd.f32 %v614, %v615
        %v617 = vsel %vm536, %v510, 0.0
        %v618 = vadd.f32 %v616, %v617
        %v619 = vsel %vm536, %v513, 0.0
        %v620 = vadd.f32 %v618, %v619
        %v621 = vsel %vm536, %v516, 0.0
        %v622 = vadd.f32 %v620, %v621
        %v623 = vsel %vm536, %v519, 0.0
        %v624 = vadd.f32 %v622, %v623
        %v625 = vsel %vm536, %v522, 0.0
        %v626 = vadd.f32 %v624, %v625
        %v627 = vsel %vm536, %v525, 0.0
        %v628 = vadd.f32 %v626, %v627
        %v629 = vsel %vm536, %v528, 0.0
        %v630 = vadd.f32 %v628, %v629
        %v631 = vsel %vm536, %v531, 0.0
        %v632 = vadd.f32 %v630, %v631
        %v633 = vsel %vm536, %v534, 0.0
        %v634 = vadd.f32 %v632, %v633
        %v635 = vrot.slane %v634, 4
        %v636 = vadd.f32 %v634, %v635
        %v637 = vrot.slane %v636, 2
        %v638 = vadd.f32 %v636, %v637
        %v639 = vrot.slane %v638, 1
        %v640 = vadd.f32 %v638, %v639
        %v641 = vstv %s571
        %v642 = vrcp.pop %v641
        %v643 = vmul.f32 %v641, %v642
        %v644 = vsub.f32 1.0, %v643
        %v645 = vmul.f32 %v642, %v644
        %v646 = vadd.f32 %v642, %v645
        %vm647 = vweird.f32 %v641
        %vm648 = vweird.f32 %v642
        %vm649 = vmor %vm647, %vm648
        %v650 = vsel %vm649, %v642, %v646
        %v651 = vand.u32 2147483647, %v641
        %vm652 = vcmp.eq.f32.partialorder %v651, 8.507059e+37
        %v653 = vand.u32 %v641, 2147483648
        %v654 = vor.u32 1.1754944e-38, %v653
        %v655 = vsel %vm652, %v654, %v650
        %v656 = vmul.f32 %v640, %v655
        %v657 = vsub.f32 %v441, %v656
        %v658 = vsub.f32 %v444, %v656
        %v659 = vsub.f32 %v447, %v656
        %v660 = vsub.f32 %v450, %v656
        %v661 = vsub.f32 %v453, %v656
        %v662 = vsub.f32 %v456, %v656
        %v663 = vsub.f32 %v459, %v656
        %v664 = vsub.f32 %v462, %v656
        %v665 = vsub.f32 %v465, %v656
        %v666 = vsub.f32 %v468, %v656
        %v667 = vsub.f32 %v471, %v656
        %v668 = vsub.f32 %v474, %v656
        %v669 = vsub.f32 %v477, %v656
        %v670 = vsub.f32 %v480, %v656
        %v671 = vsub.f32 %v483, %v656
        %v672 = vsub.f32 %v486, %v656
        %v673 = vsub.f32 %v489, %v656
        %v674 = vsub.f32 %v492, %v656
        %v675 = vsub.f32 %v495, %v656
        %v676 = vsub.f32 %v498, %v656
        %v677 = vsub.f32 %v501, %v656
        %v678 = vsub.f32 %v504, %v656
        %v679 = vsub.f32 %v507, %v656
        %v680 = vsub.f32 %v510, %v656
        %v681 = vsub.f32 %v513, %v656
        %v682 = vsub.f32 %v516, %v656
        %v683 = vsub.f32 %v519, %v656
        %v684 = vsub.f32 %v522, %v656
        %v685 = vsub.f32 %v525, %v656
        %v686 = vsub.f32 %v528, %v656
        %v687 = vsub.f32 %v531, %v656
        %v688 = vsub.f32 %v534, %v656
        %v689 = vmul.f32 %v657, %v657
        %v690 = vmul.f32 %v658, %v658
        %v691 = vmul.f32 %v659, %v659
        %v692 = vmul.f32 %v660, %v660
        %v693 = vmul.f32 %v661, %v661
        %v694 = vmul.f32 %v662, %v662
        %v695 = vmul.f32 %v663, %v663
        %v696 = vmul.f32 %v664, %v664
        %v697 = vmul.f32 %v665, %v665
        %v698 = vmul.f32 %v666, %v666
        %v699 = vmul.f32 %v667, %v667
        %v700 = vmul.f32 %v668, %v668
        %v701 = vmul.f32 %v669, %v669
        %v702 = vmul.f32 %v670, %v670
        %v703 = vmul.f32 %v671, %v671
        %v704 = vmul.f32 %v672, %v672
        %v705 = vmul.f32 %v673, %v673
        %v706 = vmul.f32 %v674, %v674
        %v707 = vmul.f32 %v675, %v675
        %v708 = vmul.f32 %v676, %v676
        %v709 = vmul.f32 %v677, %v677
        %v710 = vmul.f32 %v678, %v678
        %v711 = vmul.f32 %v679, %v679
        %v712 = vmul.f32 %v680, %v680
        %v713 = vmul.f32 %v681, %v681
        %v714 = vmul.f32 %v682, %v682
        %v715 = vmul.f32 %v683, %v683
        %v716 = vmul.f32 %v684, %v684
        %v717 = vmul.f32 %v685, %v685
        %v718 = vmul.f32 %v686, %v686
        %v719 = vmul.f32 %v687, %v687
        %v720 = vmul.f32 %v688, %v688
        %v721 = vsel %vm256, 1, 0
        %v722 = vsel %vm257, 1, 0
        %v723 = vsel %vm258, 1, 0
        %v724 = vsel %vm259, 1, 0
        %v725 = vsel %vm260, 1, 0
        %v726 = vsel %vm261, 1, 0
        %v727 = vsel %vm262, 1, 0
        %v728 = vsel %vm263, 1, 0
        %v729 = vsel %vm264, 1, 0
        %v730 = vsel %vm265, 1, 0
        %v731 = vsel %vm266, 1, 0
        %v732 = vsel %vm267, 1, 0
        %v733 = vsel %vm268, 1, 0
        %v734 = vsel %vm269, 1, 0
        %v735 = vsel %vm270, 1, 0
        %v736 = vsel %vm271, 1, 0
        %v737 = vsel %vm272, 1, 0
        %v738 = vsel %vm273, 1, 0
        %v739 = vsel %vm274, 1, 0
        %v740 = vsel %vm275, 1, 0
        %v741 = vsel %vm276, 1, 0
        %v742 = vsel %vm277, 1, 0
        %v743 = vsel %vm278, 1, 0
        %v744 = vsel %vm279, 1, 0
        %v745 = vsel %vm280, 1, 0
        %v746 = vsel %vm281, 1, 0
        %v747 = vsel %vm282, 1, 0
        %v748 = vsel %vm283, 1, 0
        %v749 = vsel %vm284, 1, 0
        %v750 = vsel %vm285, 1, 0
        %v751 = vsel %vm286, 1, 0
        %v752 = vsel %vm287, 1, 0
        %vm753 = vcmp.eq.s32.totalorder %v721, 1
        %vm754 = vcmp.eq.s32.totalorder %v722, 1
        %vm755 = vcmp.eq.s32.totalorder %v723, 1
        %vm756 = vcmp.eq.s32.totalorder %v724, 1
        %vm757 = vcmp.eq.s32.totalorder %v725, 1
        %vm758 = vcmp.eq.s32.totalorder %v726, 1
        %vm759 = vcmp.eq.s32.totalorder %v727, 1
        %vm760 = vcmp.eq.s32.totalorder %v728, 1
        %vm761 = vcmp.eq.s32.totalorder %v729, 1
        %vm762 = vcmp.eq.s32.totalorder %v730, 1
        %vm763 = vcmp.eq.s32.totalorder %v731, 1
        %vm764 = vcmp.eq.s32.totalorder %v732, 1
        %vm765 = vcmp.eq.s32.totalorder %v733, 1
        %vm766 = vcmp.eq.s32.totalorder %v734, 1
        %vm767 = vcmp.eq.s32.totalorder %v735, 1
        %vm768 = vcmp.eq.s32.totalorder %v736, 1
        %vm769 = vcmp.eq.s32.totalorder %v737, 1
        %vm770 = vcmp.eq.s32.totalorder %v738, 1
        %vm771 = vcmp.eq.s32.totalorder %v739, 1
        %vm772 = vcmp.eq.s32.totalorder %v740, 1
        %vm773 = vcmp.eq.s32.totalorder %v741, 1
        %vm774 = vcmp.eq.s32.totalorder %v742, 1
        %vm775 = vcmp.eq.s32.totalorder %v743, 1
        %vm776 = vcmp.eq.s32.totalorder %v744, 1
        %vm777 = vcmp.eq.s32.totalorder %v745, 1
        %vm778 = vcmp.eq.s32.totalorder %v746, 1
        %vm779 = vcmp.eq.s32.totalorder %v747, 1
        %vm780 = vcmp.eq.s32.totalorder %v748, 1
        %vm781 = vcmp.eq.s32.totalorder %v749, 1
        %vm782 = vcmp.eq.s32.totalorder %v750, 1
        %vm783 = vcmp.eq.s32.totalorder %v751, 1
        %vm784 = vcmp.eq.s32.totalorder %v752, 1
        %v785 = vsel %vm753, %v689, 0.0
        %v786 = vsel %vm754, %v690, 0.0
        %v787 = vsel %vm755, %v691, 0.0
        %v788 = vsel %vm756, %v692, 0.0
        %v789 = vsel %vm757, %v693, 0.0
        %v790 = vsel %vm758, %v694, 0.0
        %v791 = vsel %vm759, %v695, 0.0
        %v792 = vsel %vm760, %v696, 0.0
        %v793 = vsel %vm761, %v697, 0.0
        %v794 = vsel %vm762, %v698, 0.0
        %v795 = vsel %vm763, %v699, 0.0
        %v796 = vsel %vm764, %v700, 0.0
        %v797 = vsel %vm765, %v701, 0.0
        %v798 = vsel %vm766, %v702, 0.0
        %v799 = vsel %vm767, %v703, 0.0
        %v800 = vsel %vm768, %v704, 0.0
        %v801 = vsel %vm769, %v705, 0.0
        %v802 = vsel %vm770, %v706, 0.0
        %v803 = vsel %vm771, %v707, 0.0
        %v804 = vsel %vm772, %v708, 0.0
        %v805 = vsel %vm773, %v709, 0.0
        %v806 = vsel %vm774, %v710, 0.0
        %v807 = vsel %vm775, %v711, 0.0
        %v808 = vsel %vm776, %v712, 0.0
        %v809 = vsel %vm777, %v713, 0.0
        %v810 = vsel %vm778, %v714, 0.0
        %v811 = vsel %vm779, %v715, 0.0
        %v812 = vsel %vm780, %v716, 0.0
        %v813 = vsel %vm781, %v717, 0.0
        %v814 = vsel %vm782, %v718, 0.0
        %v815 = vsel %vm783, %v719, 0.0
        %v816 = vsel %vm784, %v720, 0.0
        %vm817 = vcmask 122880
        %818 = vst.msk [vmem:[%s201] sm:$0x1] %vm817, %v640
        %v819 = vsel %vm536, %v785, 0.0
        %v820 = vsel %vm536, %v786, 0.0
        %v821 = vadd.f32 %v819, %v820
        %v822 = vsel %vm536, %v787, 0.0
        %v823 = vadd.f32 %v821, %v822
        %v824 = vsel %vm536, %v788, 0.0
        %v825 = vadd.f32 %v823, %v824
        %v826 = vsel %vm536, %v789, 0.0
        %v827 = vadd.f32 %v825, %v826
        %v828 = vsel %vm536, %v790, 0.0
        %v829 = vadd.f32 %v827, %v828
        %v830 = vsel %vm536, %v791, 0.0
        %v831 = vadd.f32 %v829, %v830
        %v832 = vsel %vm536, %v792, 0.0
        %v833 = vadd.f32 %v831, %v832
        %v834 = vsel %vm536, %v793, 0.0
        %v835 = vadd.f32 %v833, %v834
        %v836 = vsel %vm536, %v794, 0.0
        %v837 = vadd.f32 %v835, %v836
        %v838 = vsel %vm536, %v795, 0.0
        %v839 = vadd.f32 %v837, %v838
        %v840 = vsel %vm536, %v796, 0.0
        %v841 = vadd.f32 %v839, %v840
        %v842 = vsel %vm536, %v797, 0.0
        %v843 = vadd.f32 %v841, %v842
        %v844 = vsel %vm536, %v798, 0.0
        %v845 = vadd.f32 %v843, %v844
        %v846 = vsel %vm536, %v799, 0.0
        %v847 = vadd.f32 %v845, %v846
        %v848 = vsel %vm536, %v800, 0.0
        %v849 = vadd.f32 %v847, %v848
        %v850 = vsel %vm536, %v801, 0.0
        %v851 = vadd.f32 %v849, %v850
        %v852 = vsel %vm536, %v802, 0.0
        %v853 = vadd.f32 %v851, %v852
        %v854 = vsel %vm536, %v803, 0.0
        %v855 = vadd.f32 %v853, %v854
        %v856 = vsel %vm536, %v804, 0.0
        %v857 = vadd.f32 %v855, %v856
        %v858 = vsel %vm536, %v805, 0.0
        %v859 = vadd.f32 %v857, %v858
        %v860 = vsel %vm536, %v806, 0.0
        %v861 = vadd.f32 %v859, %v860
        %v862 = vsel %vm536, %v807, 0.0
        %v863 = vadd.f32 %v861, %v862
        %v864 = vsel %vm536, %v808, 0.0
        %v865 = vadd.f32 %v863, %v864
        %v866 = vsel %vm536, %v809, 0.0
        %v867 = vadd.f32 %v865, %v866
        %v868 = vsel %vm536, %v810, 0.0
        %v869 = vadd.f32 %v867, %v868
        %v870 = vsel %vm536, %v811, 0.0
        %v871 = vadd.f32 %v869, %v870
        %v872 = vsel %vm536, %v812, 0.0
        %v873 = vadd.f32 %v871, %v872
        %v874 = vsel %vm536, %v813, 0.0
        %v875 = vadd.f32 %v873, %v874
        %v876 = vsel %vm536, %v814, 0.0
        %v877 = vadd.f32 %v875, %v876
        %v878 = vsel %vm536, %v815, 0.0
        %v879 = vadd.f32 %v877, %v878
        %v880 = vsel %vm536, %v816, 0.0
        %v881 = vadd.f32 %v879, %v880
        %v882 = vrot.slane %v881, 4
        %v883 = vadd.f32 %v881, %v882
        %v884 = vrot.slane %v883, 2
        %v885 = vadd.f32 %v883, %v884
        %v886 = vrot.slane %v885, 1
        %v887 = vadd.f32 %v885, %v886
        %888 = vst.msk [vmem:[%s207] sm:$0x1] %vm817, %v887
        %s889 = smul.u32 32, %s22
        %p890 = scmp.lt.s32.totalorder %s889, 127
        %s891 = scalar_select %p890, %s889, 127
        %s892 = smul.addr %s891, 8
        %s893 = scalar_lea.vmem %s2, %s892
        %s894 = sand.u32 %s103, 1
        %s895 = scalar_lea.sflag [#allocation3], %s894
        %s896 = sand.u32 %s103, 1
        %s897 = scalar_lea.vmem [#allocation2], %s896
        %s898 = sand.u32 %s129, 1
        %s899 = scalar_lea.sflag [#allocation5], %s898
        %s900 = sand.u32 %s129, 1
        %s901 = scalar_lea.vmem [#allocation4], %s900
        // Predicated region
        $region29: #{tpu_custom_call.1} parent=27 // pred_check
          %p902 = pneg %p87
        $region30: #{tpu_custom_call.1} parent=27 // pred_check_branch
          %904 = sbr.rel (%p902) target = $region32
        $region31: #{tpu_custom_call.1} parent=27 // pred_region
          %s905 = smul.u32 32, %s22
        $region32: #{tpu_custom_call.1} parent=27 // pred_fallthru
          _
        // Predicated region
        $region33: #{tpu_custom_call.1} parent=27 // pred_check
          %p906 = pneg %p113
        $region34: #{tpu_custom_call.1} parent=27 // pred_check_branch
          %908 = sbr.rel (%p906) target = $region36
        $region35: #{tpu_custom_call.1} parent=27 // pred_region
          %910 = vsyncadd %s895, 0
          %s911 = scalar_lea.hbm %s3, %s22
          %s913 = sshll.u32 %s897, 4
          %s914 = int_to_ptr.vmem [resolvable:$true] %s913
          %s915 = sshll.u32 %s911, 4
          %s916 = int_to_ptr.hbm [resolvable:$true] %s915
          %918 = dma.vmem_to_hbm [thread:$0]  %s914, 16, %s916, %s895
        $region36: #{tpu_custom_call.1} parent=27 // pred_fallthru
          _
        // Predicated region
        $region37: #{tpu_custom_call.1} parent=27 // pred_check
          %p919 = pneg %p139
        $region38: #{tpu_custom_call.1} parent=27 // pred_check_branch
          %921 = sbr.rel (%p919) target = $region40
        $region39: #{tpu_custom_call.1} parent=27 // pred_region
          %923 = vsyncadd %s899, 0
          %s924 = scalar_lea.hbm %s4, %s22
          %s926 = sshll.u32 %s901, 4
          %s927 = int_to_ptr.vmem [resolvable:$true] %s926
          %s928 = sshll.u32 %s924, 4
          %s929 = int_to_ptr.hbm [resolvable:$true] %s928
          %931 = dma.vmem_to_hbm [thread:$0]  %s927, 16, %s929, %s899
        $region40: #{tpu_custom_call.1} parent=27 // pred_fallthru
          _
      $region28: #{tpu_custom_call.1} parent=5 // pred_fallthru
        _
      %p932 = scmp.le.s32.totalorder 2, %s17
      // Predicated region
      $region41: #{tpu_custom_call.1} parent=5 // pred_check
        %p933 = pneg %p932
      $region42: #{tpu_custom_call.1} parent=5 // pred_check_branch
        %935 = sbr.rel (%p933) target = $region44
      $region43: #{tpu_custom_call.1} parent=5 // pred_region
        %s936 = ssub.s32 %s17, 2
        // Predicated region
        $region45: #{tpu_custom_call.1} parent=43 // pred_check
          %p937 = pneg %p93
        $region46: #{tpu_custom_call.1} parent=43 // pred_check_branch
          %939 = sbr.rel (%p937) target = $region48
        $region47: #{tpu_custom_call.1} parent=43 // pred_region
          %s940 = smul.u32 32, %s23
          %p941 = scmp.lt.s32.totalorder %s940, 127
          %s942 = scalar_select %p941, %s940, 127
          %s943 = smul.addr %s942, 8
          %s944 = scalar_lea.vmem %s2, %s943
        $region48: #{tpu_custom_call.1} parent=43 // pred_fallthru
          _
        // Predicated region
        $region49: #{tpu_custom_call.1} parent=43 // pred_check
          %p945 = pneg %p119
        $region50: #{tpu_custom_call.1} parent=43 // pred_check_branch
          %947 = sbr.rel (%p945) target = $region52
        $region51: #{tpu_custom_call.1} parent=43 // pred_region
          %s948 = sand.u32 %s104, 1
          %s949 = scalar_lea.sflag [#allocation3], %s948
          %s950 = sand.u32 %s104, 1
          %s951 = scalar_lea.vmem [#allocation2], %s950
          %953 = dma.done %s949, 16
        $region52: #{tpu_custom_call.1} parent=43 // pred_fallthru
          _
        // Predicated region
        $region53: #{tpu_custom_call.1} parent=43 // pred_check
          %p954 = pneg %p145
        $region54: #{tpu_custom_call.1} parent=43 // pred_check_branch
          %956 = sbr.rel (%p954) target = $region56
        $region55: #{tpu_custom_call.1} parent=43 // pred_region
          %s957 = sand.u32 %s130, 1
          %s958 = scalar_lea.sflag [#allocation5], %s957
          %s959 = sand.u32 %s130, 1
          %s960 = scalar_lea.vmem [#allocation4], %s959
          %962 = dma.done %s958, 16
        $region56: #{tpu_custom_call.1} parent=43 // pred_fallthru
          _
      $region44: #{tpu_custom_call.1} parent=5 // pred_fallthru
        _
    $region6: #{tpu_custom_call.1} parent=1 // loop_footer
      %s21 = sadd.s32 1, %s17
    $region7: #{tpu_custom_call.1} parent=1 // loop_footer_branch
      %16 = sbr.rel target = $region3
    $region8: #{tpu_custom_call.1} parent=1 // loop_exit
      _
    %963 = vsyncpa [#allocation3], 1
    %s964 = scalar_lea.sflag [#allocation3], 1
    %965 = vsyncpa %s964, 1
    %966 = vsyncpa [#allocation5], 1
    %s967 = scalar_lea.sflag [#allocation5], 1
    %968 = vsyncpa %s967, 1

</llo_original>
